<compile_context>
chip_gen: v6e
topology: v6e:2x2x1
jax: 0.10.0
libtpu: 0.0.40
codegen_flags: <defaults>
</compile_context>

<pallas_src>
import functools

import jax
import jax.numpy as jnp
from jax import lax
from jax.experimental import pallas as pl
from jax.experimental.pallas import tpu as pltpu


def _group_norm_kernel(x_ref, scale_ref, shift_ref, o_ref, *,
                       eps: float, inv_n: float, gb: int, g_blocks: int):
    # x_ref:               (Bb, Gb, rows, L)  fused (batch, group) slabs
    # scale_ref/shift_ref: (G, rows)          per-(group, row) affine
    # o_ref:               (Bb, Gb, rows, L)
    xf = x_ref[...].astype(jnp.float32)

    # One pass over the VMEM-resident block: sum and sum-of-squares per (b, g).
    s = jnp.sum(xf, axis=-1, keepdims=True)
    s = jnp.sum(s, axis=-2, keepdims=True)              # (Bb, Gb, 1, 1)
    s2 = jnp.sum(xf * xf, axis=-1, keepdims=True)
    s2 = jnp.sum(s2, axis=-2, keepdims=True)            # (Bb, Gb, 1, 1)

    mean = s * inv_n
    var = jnp.maximum(s2 * inv_n - mean * mean, 0.0)    # clamp f32 cancellation
    inv_std = lax.rsqrt(var + eps)                      # (Bb, Gb, 1, 1)

    # Per-(group, row) affine for this block's groups (sliced from the
    # once-DMA'd full table).
    if g_blocks == 1:
        sc = scale_ref[...]
        sh = shift_ref[...]
    else:
        start = pl.multiple_of(pl.program_id(1) * gb, gb)
        sc = scale_ref[pl.ds(start, gb), :]
        sh = shift_ref[pl.ds(start, gb), :]
    sc = sc.astype(jnp.float32)[jnp.newaxis, :, :, jnp.newaxis]   # (1, Gb, rows, 1)
    sh = sh.astype(jnp.float32)[jnp.newaxis, :, :, jnp.newaxis]

    # Fused affine:  o = x * a + b
    a = sc * inv_std                                    # (Bb, Gb, rows, 1)
    b = sh - mean * a
    o_ref[...] = (xf * a + b).astype(o_ref.dtype)


def _largest_proper_divisor(n: int) -> int:
    for d in range(n // 2, 0, -1):
        if n % d == 0:
            return d
    return 1


def _pick_lane_width(cpg: int, hw: int) -> int:
    """Lane width L: a multiple of 128 dividing hw; prefer rows >= 8."""
    if hw % 128 != 0:
        # TODO(synk): pad H*W to a multiple of 128 (with masked stats) for
        # lane-dense stores; fall back to the natural (cpg, hw) layout.
        return hw
    best = 128
    for l in range(128, hw + 1, 128):
        if hw % l == 0 and (cpg * hw) // l >= 8:
            best = l
    return best


def _pick_block_dims(B: int, G: int, group_elems: int, target_elems: int):
    """Fuse groups (then batch) into blocks up to ~target_elems elements."""
    gb = 1
    for d in range(1, G + 1):
        if G % d == 0 and d * group_elems <= target_elems:
            gb = d
    bb = 1
    if gb == G:
        for d in range(1, B + 1):
            if B % d == 0 and d * G * group_elems <= target_elems:
                bb = d
    # Keep >= 2 grid steps so both v7x TensorCores get work.
    if (B // bb) * (G // gb) == 1 and B * G >= 2:
        if B >= 2:
            bb = _largest_proper_divisor(B)
        else:
            gb = _largest_proper_divisor(G)
    return bb, gb


def group_norm(x, scale, shift, *, groups: int, eps: float = 1e-5):
    """GroupNorm forward. x: (B, C, H, W) NCHW; scale/shift: (C,)."""
    B, C, H, W = x.shape
    assert C % groups == 0
    G = groups
    cpg = C // G
    hw = H * W

    # Lane-dense fold of each group's (cpg, hw) slab into (rows, L).
    L = _pick_lane_width(cpg, hw)
    reps = hw // L                       # rows per channel
    rows = cpg * reps
    group_elems = rows * L               # == cpg * hw

    x_r = x.reshape(B, G, rows, L)       # contiguous reshape, no data movement

    # Per-(group, row) affine; row r belongs to channel r // reps of its group.
    scale_rows = jnp.repeat(scale.reshape(G, cpg), reps, axis=1)   # (G, rows)
    shift_rows = jnp.repeat(shift.reshape(G, cpg), reps, axis=1)   # (G, rows)

    # ~1 MiB (f32) blocks: near HBM roofline, fits comfortably on v7x VMEM.
    target_elems = 256 * 1024
    bb, gb = _pick_block_dims(B, G, group_elems, target_elems)
    b_blocks = B // bb
    g_blocks = G // gb

    # TODO(synk): for groups whose cpg*H*W slab exceeds the VMEM budget
    # (notably v7x's 64 MiB VMEM), switch to a two-pass hw-tiled scheme
    # (accumulate sum/sum-of-squares, then normalize) instead of requiring a
    # whole group resident per block.

    block_elems = bb * gb * group_elems
    itemsize = jnp.dtype(x.dtype).itemsize
    # in + out double-buffered, plus headroom for in-kernel f32 temporaries.
    vmem_needed = 4 * block_elems * itemsize + 8 * block_elems * 4
    vmem_limit = max(32 * 1024 * 1024, min(64 * 1024 * 1024, int(vmem_needed)))

    total_elems = B * C * hw
    cost = pl.CostEstimate(
        flops=6 * total_elems,
        transcendentals=B * G,
        bytes_accessed=2 * total_elems * itemsize,
    )

    kernel = functools.partial(
        _group_norm_kernel,
        eps=eps, inv_n=1.0 / group_elems, gb=gb, g_blocks=g_blocks,
    )

    out = pl.pallas_call(
        kernel,
        out_shape=jax.ShapeDtypeStruct((B, G, rows, L), x.dtype),
        grid=(b_blocks, g_blocks),
        in_specs=[
            pl.BlockSpec((bb, gb, rows, L), lambda bi, gi: (bi, gi, 0, 0)),
            # Untiled + constant index_map: scale/shift DMA'd once, not per step.
            pl.BlockSpec((G, rows), lambda bi, gi: (0, 0)),
            pl.BlockSpec((G, rows), lambda bi, gi: (0, 0)),
        ],
        out_specs=pl.BlockSpec((bb, gb, rows, L), lambda bi, gi: (bi, gi, 0, 0)),
        compiler_params=pltpu.CompilerParams(
            dimension_semantics=("parallel", "parallel"),
            vmem_limit_bytes=vmem_limit,
        ),
        cost_estimate=cost,
    )(x_r, scale_rows, shift_rows)

    return out.reshape(B, C, H, W)


def group_norm_ref(x, scale, shift, *, groups: int, eps: float = 1e-5):
    """Pure-JAX reference mirroring the PyTorch module."""
    B, C, H, W = x.shape
    xg = x.reshape(B, groups, -1).astype(jnp.float32)
    mean = xg.mean(axis=-1, keepdims=True)
    mean_x2 = (xg ** 2).mean(axis=-1, keepdims=True)
    var = mean_x2 - mean ** 2
    x_norm = (xg - mean) / jnp.sqrt(var + eps)
    x_norm = x_norm.reshape(B, C, -1)
    x_norm = scale.reshape(1, -1, 1) * x_norm + shift.reshape(1, -1, 1)
    return x_norm.reshape(B, C, H, W).astype(x.dtype)


if __name__ == "__main__":
    # Module config: GroupNorm(groups=2, channels=4, eps=1e-5, affine=True)
    groups, channels = 2, 4
    eps = 1e-5
    B, H, W = 2, 16, 16

    key = jax.random.PRNGKey(0)
    kx, ks, kb = jax.random.split(key, 3)
    x = jax.random.normal(kx, (B, channels, H, W), dtype=jnp.float32)
    # Non-trivial (but deterministic) affine parameters to exercise the
    # per-channel scale/shift path.
    scale = 1.0 + 0.1 * jax.random.normal(ks, (channels,), dtype=jnp.float32)
    shift = 0.1 * jax.random.normal(kb, (channels,), dtype=jnp.float32)

    out = group_norm(x, scale, shift, groups=groups, eps=eps)
    out = jax.block_until_ready(out)

    ref = group_norm_ref(x, scale, shift, groups=groups, eps=eps)
    assert out.shape == x.shape
    assert jnp.allclose(out, ref, atol=1e-5, rtol=1e-5)

    print("KERNEL_OK")
</pallas_src>

<mosaic_0001>
module attributes {stable_mosaic.version = 11 : i64} {
  func.func @_group_norm_kernel(%arg0: i32, %arg1: i32, %arg2: memref<1x2x4x128xf32, #tpu.memory_space<vmem>>, %arg3: memref<2x4xf32, #tpu.memory_space<vmem>>, %arg4: memref<2x4xf32, #tpu.memory_space<vmem>>, %arg5: memref<1x2x4x128xf32, #tpu.memory_space<vmem>>) attributes {dimension_semantics = [#tpu.dimension_semantics<parallel>, #tpu.dimension_semantics<parallel>], iteration_bounds = array<i64: 2, 1>, scalar_prefetch = 0 : i64, scratch_operands = 0 : i64, tpu.core_type = #tpu.core_type<tc>, window_params = [{transform_indices = @transform_0, window_bounds = array<i64: 1, 2, 4, 128>}, {pipeline_mode = #tpu.pipeline_mode<synchronous>, transform_indices = @transform_1, window_bounds = array<i64: 2, 4>}, {pipeline_mode = #tpu.pipeline_mode<synchronous>, transform_indices = @transform_2, window_bounds = array<i64: 2, 4>}, {transform_indices = @transform_3, window_bounds = array<i64: 1, 2, 4, 128>}]} {
    %c0 = arith.constant 0 : index
    %c0_0 = arith.constant 0 : index
    %c0_1 = arith.constant 0 : index
    %c0_2 = arith.constant 0 : index
    %0 = vector.load %arg2[%c0, %c0_0, %c0_1, %c0_2] : memref<1x2x4x128xf32, #tpu.memory_space<vmem>>, vector<1x2x4x128xf32>
    %cst = arith.constant dense<0.000000e+00> : vector<1x2x4xf32>
    %1 = vector.multi_reduction <add>, %0, %cst [3] : vector<1x2x4x128xf32> to vector<1x2x4xf32>
    %2 = vector.shape_cast %1 : vector<1x2x4xf32> to vector<1x2x4x1xf32>
    %cst_3 = arith.constant dense<0.000000e+00> : vector<1x2x1xf32>
    %3 = vector.multi_reduction <add>, %2, %cst_3 [2] : vector<1x2x4x1xf32> to vector<1x2x1xf32>
    %4 = vector.shape_cast %3 : vector<1x2x1xf32> to vector<1x2x1x1xf32>
    %5 = arith.mulf %0, %0 : vector<1x2x4x128xf32>
    %cst_4 = arith.constant dense<0.000000e+00> : vector<1x2x4xf32>
    %6 = vector.multi_reduction <add>, %5, %cst_4 [3] : vector<1x2x4x128xf32> to vector<1x2x4xf32>
    %7 = vector.shape_cast %6 : vector<1x2x4xf32> to vector<1x2x4x1xf32>
    %cst_5 = arith.constant dense<0.000000e+00> : vector<1x2x1xf32>
    %8 = vector.multi_reduction <add>, %7, %cst_5 [2] : vector<1x2x4x1xf32> to vector<1x2x1xf32>
    %9 = vector.shape_cast %8 : vector<1x2x1xf32> to vector<1x2x1x1xf32>
    %cst_6 = arith.constant 0.001953125 : f32
    %10 = vector.broadcast %cst_6 : f32 to vector<1x2x1x1xf32>
    %11 = arith.mulf %4, %10 : vector<1x2x1x1xf32>
    %cst_7 = arith.constant 0.001953125 : f32
    %12 = vector.broadcast %cst_7 : f32 to vector<1x2x1x1xf32>
    %13 = arith.mulf %9, %12 : vector<1x2x1x1xf32>
    %14 = arith.mulf %11, %11 : vector<1x2x1x1xf32>
    %15 = arith.subf %13, %14 : vector<1x2x1x1xf32>
    %cst_8 = arith.constant 0.000000e+00 : f32
    %16 = vector.broadcast %cst_8 : f32 to vector<1x2x1x1xf32>
    %17 = arith.maximumf %15, %16 : vector<1x2x1x1xf32>
    %cst_9 = arith.constant 9.99999974E-6 : f32
    %18 = vector.broadcast %cst_9 : f32 to vector<1x2x1x1xf32>
    %19 = arith.addf %17, %18 : vector<1x2x1x1xf32>
    %20 = math.rsqrt %19 : vector<1x2x1x1xf32>
    %c0_10 = arith.constant 0 : index
    %c0_11 = arith.constant 0 : index
    %21 = vector.load %arg3[%c0_10, %c0_11] : memref<2x4xf32, #tpu.memory_space<vmem>>, vector<2x4xf32>
    %c0_12 = arith.constant 0 : index
    %c0_13 = arith.constant 0 : index
    %22 = vector.load %arg4[%c0_12, %c0_13] : memref<2x4xf32, #tpu.memory_space<vmem>>, vector<2x4xf32>
    %23 = vector.shape_cast %21 : vector<2x4xf32> to vector<1x2x4x1xf32>
    %24 = vector.shape_cast %22 : vector<2x4xf32> to vector<1x2x4x1xf32>
    %25 = vector.broadcast %20 : vector<1x2x1x1xf32> to vector<1x2x4x1xf32>
    %26 = arith.mulf %23, %25 : vector<1x2x4x1xf32>
    %27 = vector.broadcast %11 : vector<1x2x1x1xf32> to vector<1x2x4x1xf32>
    %28 = arith.mulf %27, %26 : vector<1x2x4x1xf32>
    %29 = arith.subf %24, %28 : vector<1x2x4x1xf32>
    %30 = vector.broadcast %26 : vector<1x2x4x1xf32> to vector<1x2x4x128xf32>
    %31 = arith.mulf %0, %30 : vector<1x2x4x128xf32>
    %32 = vector.broadcast %29 : vector<1x2x4x1xf32> to vector<1x2x4x128xf32>
    %33 = arith.addf %31, %32 : vector<1x2x4x128xf32>
    %c0_14 = arith.constant 0 : index
    %c0_15 = arith.constant 0 : index
    %c0_16 = arith.constant 0 : index
    %c0_17 = arith.constant 0 : index
    %34 = vector.load %arg5[%c0_14, %c0_15, %c0_16, %c0_17] : memref<1x2x4x128xf32, #tpu.memory_space<vmem>>, vector<1x2x4x128xf32>
    tpu.vector_store %arg5[%c0_14, %c0_15, %c0_16, %c0_17], %33 {strides = array<i32>} : memref<1x2x4x128xf32, #tpu.memory_space<vmem>>, vector<1x2x4x128xf32>,
    return
  }
  func.func @transform_0(%arg0: i32, %arg1: i32) -> (i32, i32, i32, i32) {
    %c0_i32 = arith.constant 0 : i32
    %c0_i32_0 = arith.constant 0 : i32
    %c0_i32_1 = arith.constant 0 : i32
    return %arg0, %arg1, %c0_i32, %c0_i32_0 : i32, i32, i32, i32
  }
  func.func @transform_1(%arg0: i32, %arg1: i32) -> (i32, i32) {
    %c0_i32 = arith.constant 0 : i32
    %c0_i32_0 = arith.constant 0 : i32
    %c0_i32_1 = arith.constant 0 : i32
    return %c0_i32, %c0_i32_0 : i32, i32
  }
  func.func @transform_2(%arg0: i32, %arg1: i32) -> (i32, i32) {
    %c0_i32 = arith.constant 0 : i32
    %c0_i32_0 = arith.constant 0 : i32
    %c0_i32_1 = arith.constant 0 : i32
    return %c0_i32, %c0_i32_0 : i32, i32
  }
  func.func @transform_3(%arg0: i32, %arg1: i32) -> (i32, i32, i32, i32) {
    %c0_i32 = arith.constant 0 : i32
    %c0_i32_0 = arith.constant 0 : i32
    %c0_i32_1 = arith.constant 0 : i32
    return %arg0, %arg1, %c0_i32, %c0_i32_0 : i32, i32, i32, i32
  }
}

</mosaic_0001>

<llo_original>
// kernel: tpu_custom_call.1
$region0: #{tpu_custom_call.1}
  #allocation0 [shape = 'u32[]', space=smem, size = 0x4, offset = 0x4, fixed_abs, tag = 'smem constant byte address 0x4 - core index']
  #allocation1 [shape = 'u32[144,128]{1,0:T(1,128)}', space=vmem, size = 0x12000, scoped, tag = 'internal scratch']
  %s0 = inlined_call_operand.hbm [shape: f32[2,2,4,128], index: 0, kind: input, shape index: {}]
  %s1 = inlined_call_operand.hbm [shape: f32[2,4], index: 1, kind: input, shape index: {}]
  %s2 = inlined_call_operand.vmem [shape: f32[2,4], index: 2, kind: input, shape index: {}]
  %s3 = inlined_call_operand.hbm [shape: f32[2,2,4,128], index: 3, kind: output, shape index: {}]
  %s4 = sld [smem:[#allocation0]]
  $region53: #{tpu_custom_call.1} parent=0
    _
  %s6 = ssub.s32 1, %s4
  %s7 = scalar_select 0, %s6, %s4
  $region1: #{tpu_custom_call.1} parent=0
    #allocation2 [shape = 'u8[8192]{0}', space=vmem, size = 0x2000, scoped, tag = 'input window, operand 0']
    #allocation3 [shape = 's32[2]{0}', space=sflag, size = 0x8, scoped, tag = 'scoped memory for tpu_custom_call.1']
    #allocation4 [shape = 's32[2]{0}', space=sflag, size = 0x8, scoped, tag = 'scoped memory for tpu_custom_call.1']
    #allocation5 [shape = 'u8[1024]{0}', space=vmem, size = 0x400, scoped, tag = 'input window, operand 1, single buffered']
    #allocation6 [shape = 's32[1]{0}', space=sflag, size = 0x4, scoped, tag = 'scoped memory for tpu_custom_call.1']
    #allocation7 [shape = 'u8[8192]{0}', space=vmem, size = 0x2000, scoped, tag = 'output window, operand 0']
    %8 = vsyncpa [#allocation3], 0
    %s9 = scalar_lea.sflag [#allocation3], 1
    %10 = vsyncpa %s9, 0
    %11 = vsyncpa [#allocation6], 0
    %12 = vsyncpa [#allocation4], 0
    %s13 = scalar_lea.sflag [#allocation4], 1
    %14 = vsyncpa %s13, 0
    loop: start=0, step=1, limit=4
    $region2: #{tpu_custom_call.1} parent=1 // loop_pre_header
      _
    $region3: #{tpu_custom_call.1} parent=1 // loop_header
      %s16 = sphi 0, %s20
      %p17 = scmp.ge.s32.totalorder %s16, 4
      %s23 = sphi 0, %s35
      %s24 = sphi 0, %s31
      %s25 = sphi 0, %s23
      %s26 = sphi 0, %s24
      %s27 = sphi 0, %s25
      %s28 = sphi 0, %s26
      %s40 = sphi 0, %s42
      %s43 = sphi 0, %s40
      %s44 = sphi 0, %s43
      %s60 = sphi 0, %s44
      %s64 = sphi 0, %s64
      %s66 = sphi 0, %s64
      %s67 = sphi 0, %s66
      %s81 = sphi 0, %s67
      %s85 = sphi 0, %s85
      %s87 = sphi 0, %s85
      %s88 = sphi 0, %s87
      %s102 = sphi 0, %s88
      %s110 = sphi 0, %s112
      %s113 = sphi 0, %s110
      %s114 = sphi 0, %s113
      %s130 = sphi 0, %s114
    $region4: #{tpu_custom_call.1} parent=1 // loop_header_branch
      %19 = sbr.rel (%p17) target = $region8
    $region5: #{tpu_custom_call.1} parent=1 // loop_body
      %s21 = ssub.s32 %s16, 1
      %s22 = ssub.s32 %s16, 2
      %s29 = sadd.s32 1, %s24
      %p30 = scmp.ge.s32.totalorder %s29, 1
      %s31 = scalar_select %p30, 0, %s29
      %s32 = sadd.s32 1, %s23
      %s33 = scalar_select %p30, %s32, %s23
      %p34 = scmp.ge.s32.totalorder %s33, 2
      %s35 = scalar_select %p34, 0, %s33
      %s36 = ssub.s32 %s23, %s35
      %s37 = ssub.s32 %s24, %s31
      %s38 = sor.u32 %s36, %s37
      %p39 = scmp.eq.s32.totalorder %s38, 0
      %s41 = sadd.s32 %s40, 1
      %s42 = scalar_select %p39, %s40, %s41
      %p45 = pneg %p39
      %p46 = scmp.eq.s32.totalorder %s16, 1
      %p47 = por %p45, %p46
      %p48 = scmp.ne.s32.totalorder %s40, %s43
      %p49 = scmp.eq.s32.totalorder %s16, 0
      %p50 = por %p48, %p49
      %p51 = scmp.ne.s32.totalorder %s40, %s43
      %p52 = scmp.eq.s32.totalorder %s21, 1
      %p53 = por %p51, %p52
      %p54 = scmp.ne.s32.totalorder %s43, %s44
      %p55 = scmp.eq.s32.totalorder %s21, 0
      %p56 = por %p54, %p55
      %p57 = scmp.ne.s32.totalorder %s43, %s44
      %p58 = scmp.eq.s32.totalorder %s22, 1
      %p59 = por %p57, %p58
      %p61 = scmp.ne.s32.totalorder %s44, %s60
      %p62 = scmp.eq.s32.totalorder %s22, 0
      %p63 = por %p61, %p62
      %s65 = sadd.s32 %s64, 1
      %p68 = scmp.eq.s32.totalorder %s16, 1
      %p69 = scmp.ne.s32.totalorder %s64, %s66
      %p70 = scmp.eq.s32.totalorder %s16, 0
      %p71 = por %p69, %p70
      %p72 = scmp.ne.s32.totalorder %s64, %s66
      %p73 = scmp.eq.s32.totalorder %s21, 1
      %p74 = por %p72, %p73
      %p75 = scmp.ne.s32.totalorder %s66, %s67
      %p76 = scmp.eq.s32.totalorder %s21, 0
      %p77 = por %p75, %p76
      %p78 = scmp.ne.s32.totalorder %s66, %s67
      %p79 = scmp.eq.s32.totalorder %s22, 1
      %p80 = por %p78, %p79
      %p82 = scmp.ne.s32.totalorder %s67, %s81
      %p83 = scmp.eq.s32.totalorder %s22, 0
      %p84 = por %p82, %p83
      %s86 = sadd.s32 %s85, 1
      %p89 = scmp.eq.s32.totalorder %s16, 1
      %p90 = scmp.ne.s32.totalorder %s85, %s87
      %p91 = scmp.eq.s32.totalorder %s16, 0
      %p92 = por %p90, %p91
      %p93 = scmp.ne.s32.totalorder %s85, %s87
      %p94 = scmp.eq.s32.totalorder %s21, 1
      %p95 = por %p93, %p94
      %p96 = scmp.ne.s32.totalorder %s87, %s88
      %p97 = scmp.eq.s32.totalorder %s21, 0
      %p98 = por %p96, %p97
      %p99 = scmp.ne.s32.totalorder %s87, %s88
      %p100 = scmp.eq.s32.totalorder %s22, 1
      %p101 = por %p99, %p100
      %p103 = scmp.ne.s32.totalorder %s88, %s102
      %p104 = scmp.eq.s32.totalorder %s22, 0
      %p105 = por %p103, %p104
      %s106 = ssub.s32 %s23, %s35
      %s107 = ssub.s32 %s24, %s31
      %s108 = sor.u32 %s106, %s107
      %p109 = scmp.eq.s32.totalorder %s108, 0
      %s111 = sadd.s32 %s110, 1
      %s112 = scalar_select %p109, %s110, %s111
      %p115 = pneg %p109
      %p116 = scmp.eq.s32.totalorder %s16, 1
      %p117 = por %p115, %p116
      %p118 = scmp.ne.s32.totalorder %s110, %s113
      %p119 = scmp.eq.s32.totalorder %s16, 0
      %p120 = por %p118, %p119
      %p121 = scmp.ne.s32.totalorder %s110, %s113
      %p122 = scmp.eq.s32.totalorder %s21, 1
      %p123 = por %p121, %p122
      %p124 = scmp.ne.s32.totalorder %s113, %s114
      %p125 = scmp.eq.s32.totalorder %s21, 0
      %p126 = por %p124, %p125
      %p127 = scmp.ne.s32.totalorder %s113, %s114
      %p128 = scmp.eq.s32.totalorder %s22, 1
      %p129 = por %p127, %p128
      %p131 = scmp.ne.s32.totalorder %s114, %s130
      %p132 = scmp.eq.s32.totalorder %s22, 0
      %p133 = por %p131, %p132
      %p134 = scmp.le.s32.totalorder 1, %s16
      %p135 = scmp.lt.s32.totalorder %s16, 3
      %p136 = pnand %p134, %p135
      %p137 = pneg %p136
      // Predicated region
      $region9: #{tpu_custom_call.1} parent=5 // pred_check
        _
      $region10: #{tpu_custom_call.1} parent=5 // pred_check_branch
        %139 = sbr.rel (%p136) target = $region12
      $region11: #{tpu_custom_call.1} parent=5 // pred_region
        %s140 = ssub.s32 %s16, 1
        // Predicated region
        $region13: #{tpu_custom_call.1} parent=11 // pred_check
          %p141 = pneg %p77
        $region14: #{tpu_custom_call.1} parent=11 // pred_check_branch
          %143 = sbr.rel (%p141) target = $region16
        $region15: #{tpu_custom_call.1} parent=11 // pred_region
          %s145 = ssub.s32 32, 32
          %146 = vsyncadd [#allocation6], %s145
          %s148 = sshll.u32 [#allocation5], 4
          %s149 = int_to_ptr.vmem [resolvable:$true] %s148
          %151 = dma.hbm_to_vmem [thread:$0]  %s1, 32, %s149, [#allocation6]
        $region16: #{tpu_custom_call.1} parent=11 // pred_fallthru
          _
        // Predicated region
        $region17: #{tpu_custom_call.1} parent=11 // pred_check
          %p152 = pneg %p98
        $region18: #{tpu_custom_call.1} parent=11 // pred_check_branch
          %154 = sbr.rel (%p152) target = $region20
        $region19: #{tpu_custom_call.1} parent=11 // pred_region
          _
        $region20: #{tpu_custom_call.1} parent=11 // pred_fallthru
          _
      $region12: #{tpu_custom_call.1} parent=5 // pred_fallthru
        _
      %p155 = scmp.lt.s32.totalorder %s16, 2
      // Predicated region
      $region21: #{tpu_custom_call.1} parent=5 // pred_check
        %p156 = pneg %p155
      $region22: #{tpu_custom_call.1} parent=5 // pred_check_branch
        %158 = sbr.rel (%p156) target = $region24
      $region23: #{tpu_custom_call.1} parent=5 // pred_region
        // Predicated region
        $region25: #{tpu_custom_call.1} parent=23 // pred_check
          %p159 = pneg %p50
        $region26: #{tpu_custom_call.1} parent=23 // pred_check_branch
          %161 = sbr.rel (%p159) target = $region28
        $region27: #{tpu_custom_call.1} parent=23 // pred_region
          %s162 = sand.u32 %s40, 1
          %s163 = scalar_lea.sflag [#allocation3], %s162
          %s164 = sand.u32 %s40, 1
          %s165 = smul.addr %s164, 8
          %s166 = scalar_lea.vmem [#allocation2], %s165
          %s167 = smul.u32 2, %s24
          %s169 = ssub.s32 128, 128
          %170 = vsyncadd %s163, %s169
          %s171 = smul.addr %s23, 2
          %s172 = sadd.s32 %s167, %s171
          %s173 = smul.addr %s172, 64
          %s174 = scalar_lea.hbm %s0, %s173
          %s175 = sshll.u32 %s166, 4
          %s176 = int_to_ptr.vmem [resolvable:$true] %s175
          %181 = dma.hbm_to_vmem [thread:$0]  %s174, 128, %s176, %s163, 64, 64, 4
        $region28: #{tpu_custom_call.1} parent=23 // pred_fallthru
          _
      $region24: #{tpu_custom_call.1} parent=5 // pred_fallthru
        _
      %p182 = scmp.le.s32.totalorder 1, %s16
      %p183 = scmp.lt.s32.totalorder %s16, 3
      %p184 = pnand %p182, %p183
      %p185 = pneg %p184
      // Predicated region
      $region29: #{tpu_custom_call.1} parent=5 // pred_check
        _
      $region30: #{tpu_custom_call.1} parent=5 // pred_check_branch
        %187 = sbr.rel (%p184) target = $region32
      $region31: #{tpu_custom_call.1} parent=5 // pred_region
        %s188 = ssub.s32 %s16, 1
        %s189 = sand.u32 %s43, 1
        %s190 = scalar_lea.sflag [#allocation3], %s189
        %s191 = sand.u32 %s43, 1
        %s192 = smul.addr %s191, 8
        %s193 = scalar_lea.vmem [#allocation2], %s192
        // Predicated region
        $region33: #{tpu_custom_call.1} parent=31 // pred_check
          %p194 = pneg %p56
        $region34: #{tpu_custom_call.1} parent=31 // pred_check_branch
          %196 = sbr.rel (%p194) target = $region36
        $region35: #{tpu_custom_call.1} parent=31 // pred_region
          %197 = dma.done %s190, 128
        $region36: #{tpu_custom_call.1} parent=31 // pred_fallthru
          _
        // Predicated region
        $region37: #{tpu_custom_call.1} parent=31 // pred_check
          %p198 = pneg %p77
        $region38: #{tpu_custom_call.1} parent=31 // pred_check_branch
          %200 = sbr.rel (%p198) target = $region40
        $region39: #{tpu_custom_call.1} parent=31 // pred_region
          %201 = dma.done [#allocation6], 32
        $region40: #{tpu_custom_call.1} parent=31 // pred_fallthru
          _
        %s202 = sand.u32 %s43, 1
        %s203 = scalar_lea.sflag [#allocation3], %s202
        %s204 = sand.u32 %s43, 1
        %s205 = smul.addr %s204, 8
        %s206 = scalar_lea.vmem [#allocation2], %s205
        %p207 = pneg %p56
        %p208 = pneg %p53
        %p209 = pneg %p77
        %p210 = pneg %p74
        %p211 = pneg %p98
        %p212 = pneg %p95
        %p213 = pneg %p126
        %p214 = pneg %p123
        %s215 = sand.u32 %s113, 1
        %s216 = scalar_lea.sflag [#allocation4], %s215
        %s217 = sand.u32 %s113, 1
        %s218 = smul.addr %s217, 8
        %s219 = scalar_lea.vmem [#allocation7], %s218
        %s220 = smul.u32 2, %s26
        %s221 = smul.u32 2, %s26
        %v222 = vld [vmem:[%s193] sm:$0xf]
        %v223 = vld [vmem:[%s193 + $0x4] sm:$0xf]
        %vm224 = vcmask 1043456
        %v225 = vsel %vm224, %v222, 0.0
        %226 = vadd.xlane.f32.xlu0 %v225
        %v227 = vpop.xlane.xlu0 %226
        %v228 = vsel %vm224, %v223, 0.0
        %229 = vadd.xlane.f32.xlu0 %v228
        %v230 = vpop.xlane.xlu0 %229
        %v231 = vsel %vm224, %v227, 0.0
        %v232 = vrot.slane %v231, 4
        %v233 = vadd.f32 %v231, %v232
        %v234 = vrot.slane %v233, 2
        %v235 = vadd.f32 %v233, %v234
        %v236 = vrot.slane %v235, 1
        %v237 = vadd.f32 %v235, %v236
        %v238 = vsel %vm224, %v230, 0.0
        %v239 = vrot.slane %v238, 4
        %v240 = vadd.f32 %v238, %v239
        %v241 = vrot.slane %v240, 2
        %v242 = vadd.f32 %v240, %v241
        %v243 = vrot.slane %v242, 1
        %v244 = vadd.f32 %v242, %v243
        %v245 = vmul.f32 %v222, %v222
        %v246 = vmul.f32 %v223, %v223
        %v247 = vsel %vm224, %v245, 0.0
        %248 = vadd.xlane.f32.xlu0 %v247
        %v249 = vpop.xlane.xlu0 %248
        %v250 = vsel %vm224, %v246, 0.0
        %251 = vadd.xlane.f32.xlu0 %v250
        %v252 = vpop.xlane.xlu0 %251
        %v253 = vsel %vm224, %v249, 0.0
        %v254 = vrot.slane %v253, 4
        %v255 = vadd.f32 %v253, %v254
        %v256 = vrot.slane %v255, 2
        %v257 = vadd.f32 %v255, %v256
        %v258 = vrot.slane %v257, 1
        %v259 = vadd.f32 %v257, %v258
        %v260 = vsel %vm224, %v252, 0.0
        %v261 = vrot.slane %v260, 4
        %v262 = vadd.f32 %v260, %v261
        %v263 = vrot.slane %v262, 2
        %v264 = vadd.f32 %v262, %v263
        %v265 = vrot.slane %v264, 1
        %v266 = vadd.f32 %v264, %v265
        %v267 = vmul.f32 %v237, 0.001953125
        %v268 = vmul.f32 %v244, 0.001953125
        %v269 = vmul.f32 %v259, 0.001953125
        %v270 = vmul.f32 %v266, 0.001953125
        %v271 = vmul.f32 %v267, %v267
        %v272 = vmul.f32 %v268, %v268
        %v273 = vsub.f32 %v269, %v271
        %v274 = vsub.f32 %v270, %v272
        %v275 = vmax.f32 %v273, 0.0
        %v276 = vmax.f32 %v274, 0.0
        %v277 = vadd.f32 %v275, 1e-05
        %v278 = vadd.f32 %v276, 1e-05
        %v279 = vrsqrt.pop %v277
        %v280 = vrsqrt.pop %v278
        %v281 = vld [vmem:[#allocation5] sm:$0x3]
        %v282 = vld [vmem:[%s2] sm:$0x3]
        %v283 = vlaneseq
        %v284 = vshrl.u32 %v283, 7
        %v285 = vsub.s32 0, %v284
        %v286 = vrot.slane %v281, %v285
        %288 = vbcast.lane.b32.xlu0 %v286, 256
        %v289 = vpop.permute.xlu0 %288
        %v290 = vlaneseq
        %v291 = vshrl.u32 %v290, 7
        %v292 = vsub.s32 1, %v291
        %v293 = vrot.slane %v281, %v292
        %295 = vbcast.lane.b32.xlu0 %v293, 256
        %v296 = vpop.permute.xlu0 %295
        %v297 = vlaneseq
        %v298 = vshrl.u32 %v297, 7
        %v299 = vsub.s32 0, %v298
        %v300 = vrot.slane %v282, %v299
        %302 = vbcast.lane.b32.xlu0 %v300, 256
        %v303 = vpop.permute.xlu0 %302
        %v304 = vlaneseq
        %v305 = vshrl.u32 %v304, 7
        %v306 = vsub.s32 1, %v305
        %v307 = vrot.slane %v282, %v306
        %309 = vbcast.lane.b32.xlu0 %v307, 256
        %v310 = vpop.permute.xlu0 %309
        %v311 = vmul.f32 %v289, %v279
        %v312 = vmul.f32 %v296, %v280
        %v313 = vmul.f32 %v267, %v311
        %v314 = vmul.f32 %v268, %v312
        %v315 = vsub.f32 %v303, %v313
        %v316 = vsub.f32 %v310, %v314
        %v317 = vmul.f32 %v222, %v311
        %v318 = vmul.f32 %v223, %v312
        %v319 = vadd.f32 %v317, %v315
        %v320 = vadd.f32 %v318, %v316
        %321 = vst [vmem:[%s219] sm:$0xf] %v319
        %322 = vst [vmem:[%s219 + $0x4] sm:$0xf] %v320
        %s323 = sand.u32 %s113, 1
        %s324 = scalar_lea.sflag [#allocation4], %s323
        %s325 = sand.u32 %s113, 1
        %s326 = smul.addr %s325, 8
        %s327 = scalar_lea.vmem [#allocation7], %s326
        // Predicated region
        $region41: #{tpu_custom_call.1} parent=31 // pred_check
          %p328 = pneg %p123
        $region42: #{tpu_custom_call.1} parent=31 // pred_check_branch
          %330 = sbr.rel (%p328) target = $region44
        $region43: #{tpu_custom_call.1} parent=31 // pred_region
          %s331 = smul.u32 2, %s26
          %s333 = ssub.s32 128, 128
          %334 = vsyncadd %s324, %s333
          %s335 = smul.addr %s25, 2
          %s336 = sadd.s32 %s331, %s335
          %s337 = smul.addr %s336, 64
          %s338 = scalar_lea.hbm %s3, %s337
          %s339 = sshll.u32 %s327, 4
          %s340 = int_to_ptr.vmem [resolvable:$true] %s339
          %345 = dma.vmem_to_hbm [thread:$0]  %s340, 128, %s338, %s324, 64, 64, 4
        $region44: #{tpu_custom_call.1} parent=31 // pred_fallthru
          _
      $region32: #{tpu_custom_call.1} parent=5 // pred_fallthru
        _
      %p346 = scmp.le.s32.totalorder 2, %s16
      // Predicated region
      $region45: #{tpu_custom_call.1} parent=5 // pred_check
        %p347 = pneg %p346
      $region46: #{tpu_custom_call.1} parent=5 // pred_check_branch
        %349 = sbr.rel (%p347) target = $region48
      $region47: #{tpu_custom_call.1} parent=5 // pred_region
        %s350 = ssub.s32 %s16, 2
        // Predicated region
        $region49: #{tpu_custom_call.1} parent=47 // pred_check
          %p351 = pneg %p129
        $region50: #{tpu_custom_call.1} parent=47 // pred_check_branch
          %353 = sbr.rel (%p351) target = $region52
        $region51: #{tpu_custom_call.1} parent=47 // pred_region
          %s354 = sand.u32 %s114, 1
          %s355 = scalar_lea.sflag [#allocation4], %s354
          %s356 = sand.u32 %s114, 1
          %s357 = smul.addr %s356, 8
          %s358 = scalar_lea.vmem [#allocation7], %s357
          %359 = dma.done %s355, 128
        $region52: #{tpu_custom_call.1} parent=47 // pred_fallthru
          _
      $region48: #{tpu_custom_call.1} parent=5 // pred_fallthru
        _
    $region6: #{tpu_custom_call.1} parent=1 // loop_footer
      %s20 = sadd.s32 1, %s16
    $region7: #{tpu_custom_call.1} parent=1 // loop_footer_branch
      %15 = sbr.rel target = $region3
    $region8: #{tpu_custom_call.1} parent=1 // loop_exit
      _
    %360 = vsyncpa [#allocation3], 1
    %s361 = scalar_lea.sflag [#allocation3], 1
    %362 = vsyncpa %s361, 1
    %363 = vsyncpa [#allocation6], 1
    %364 = vsyncpa [#allocation4], 1
    %s365 = scalar_lea.sflag [#allocation4], 1
    %366 = vsyncpa %s365, 1

</llo_original>
